<compile_context>
chip_gen: v6e
topology: v6e:2x2x1
jax: 0.10.0
libtpu: 0.0.40
codegen_flags: <defaults>
</compile_context>

<pallas_src>
import functools

import jax
import jax.numpy as jnp
import numpy as np
from jax.experimental import pallas as pl
from jax.experimental.pallas import tpu as pltpu


def _leaky_relu(x, slope=0.2):
    return jnp.where(x > 0, x, slope * x)


def _h_taps(a, H):
    """a: (Bt, H, L) -> [a(h-1), a(h), a(h+1)] with zero halos, each (Bt, H, L).

    Used on activated values only; leaky_relu(0) == 0, so activate-then-pad is
    exact.  All data here is lane-dense (L = W*C)."""
    Bt, _, L = a.shape
    z = jnp.zeros((Bt, 1, L), a.dtype)
    ap = jnp.concatenate([z, a, z], axis=1)                # (Bt, H+2, L)
    return [ap[:, 0:H, :], ap[:, 1:H + 1, :], ap[:, 2:H + 2, :]]


def _ac_resnet_kernel(H, W, Cin, Fh, Fout, Bt, learned_shortcut, dot_dtype,
                      x_ref, w0_ref, b0_ref, w1_ref, b1_ref, out_ref):
    """One grid step = Bt batch elements, all lane-dense (last dim = W*C).

      x   : (Bt, H, W*Cin)             f32
      w0  : (3*W*Cin, W*Fh)            dot_dtype  (block-banded, kw folded in)
      b0  : (1, W*Fh)                  f32        (bias tiled along W)
      w1  : (3*W*Fh [+W*Cin], W*Fout)  dot_dtype  (0.1 folded; shortcut stacked)
      b1  : (1, W*Fout)                f32        (0.1 folded, tiled along W)
      out : (Bt, H, W*Fout)            f32        (lane-dense store: 128 lanes)
    """
    WC, WFh, WFo = W * Cin, W * Fh, W * Fout
    M = Bt * H

    x = x_ref[...]                                         # (Bt, H, W*Cin) f32

    # conv_0(actvn(x)): one K = 3*W*Cin GEMM with f32 accumulation.
    p0 = jnp.concatenate(_h_taps(_leaky_relu(x), H), axis=-1)
    p0 = p0.reshape(M, 3 * WC).astype(dot_dtype)
    h0 = jnp.dot(p0, w0_ref[...],
                 preferred_element_type=jnp.float32) + b0_ref[...]   # (M, W*Fh)

    # conv_1(actvn(h0)) [+ folded learned 1x1 shortcut]: one GEMM,
    # K = 3*W*Fh (+ W*Cin).  0.1 scale already folded into w1/b1.
    taps = _h_taps(_leaky_relu(h0).reshape(Bt, H, WFh), H)
    if learned_shortcut:
        taps.append(x)                     # center tap feeding the 1x1 shortcut
    K1 = 3 * WFh + (WC if learned_shortcut else 0)
    p1 = jnp.concatenate(taps, axis=-1).reshape(M, K1).astype(dot_dtype)
    y = jnp.dot(p1, w1_ref[...],
                preferred_element_type=jnp.float32) + b1_ref[...]    # (M, W*Fout)

    if not learned_shortcut:
        # Identity shortcut (Cin == Fout): exact f32 add, same lane layout.
        y = y + x.reshape(M, WC)

    out_ref[...] = y.reshape(Bt, H, WFo)   # row-regroup only; lane-dense store


def _banded_conv_weight(w_hwio, W):
    """(3, 3, C, F) HWIO 3x3 conv weight -> (3*W*C, W*F) block-banded GEMM weight.

    Row index kh*(W*C) + j*C + c, column index w*F + f,
    value W[kh, j-w+1, c, f] when 0 <= j-w+1 <= 2, else 0 (this encodes both
    the kw taps and the zero padding along W)."""
    _, _, C, F = w_hwio.shape
    ind = np.zeros((3, W, W), np.float32)          # ind[kw, j, w] = [j == w+kw-1]
    for kw in range(3):
        for w in range(W):
            j = w + kw - 1
            if 0 <= j < W:
                ind[kw, j, w] = 1.0
    m = jnp.einsum('kjw,hkcf->hjcwf', jnp.asarray(ind),
                   w_hwio.astype(jnp.float32))     # (kh, j, c, w, f)
    return m.reshape(3 * W * C, W * F)


def _blockdiag_shortcut_weight(ws, W):
    """(Cin, Fout) 1x1-conv weight -> (W*Cin, W*Fout) block-diagonal replicate."""
    Cin, Fout = ws.shape
    s = jnp.einsum('jw,cf->jcwf', jnp.eye(W, dtype=jnp.float32),
                   ws.astype(jnp.float32))         # (j, c, w, f)
    return s.reshape(W * Cin, W * Fout)


def ac_resnet_block_nhwc(x, w0, b0, w1, b1, ws=None, *,
                         block_n=None, dot_dtype=jnp.bfloat16):
    """x: (N,H,W,Cin) f32; w0: (3,3,Cin,Fh); w1: (3,3,Fh,Fout); ws: (Cin,Fout)|None."""
    N, H, W, Cin = x.shape
    Fh = w0.shape[-1]
    Fout = w1.shape[-1]
    learned_shortcut = ws is not None
    if not learned_shortcut:
        assert Cin == Fout, "identity shortcut requires fin == fout"

    if block_n is None:
        # Large enough to amortize the ~0.35us per-step overhead and grow the
        # GEMM M dim, but keep >= 2 grid steps when N allows so a dual-TC chip
        # (v7x) can shard the "parallel" batch axis across both cores.
        block_n = min(N, 32)
        if N > 1:
            block_n = min(block_n, max(1, N // 2))
    nb = pl.cdiv(N, block_n)
    Np = nb * block_n

    # Lane-dense input: (N, H, W, Cin) -> (N, H, W*Cin) is a free reshape.
    x = x.astype(jnp.float32).reshape(N, H, W * Cin)
    if Np != N:
        x = jnp.pad(x, ((0, Np - N), (0, 0), (0, 0)))

    # One-time weight prep: banded kw-fold, 0.1 residual fold, shortcut stack,
    # W-tiled biases.
    w0_big = _banded_conv_weight(w0, W).astype(dot_dtype)          # (3*W*Cin, W*Fh)
    b0_big = jnp.tile(b0.astype(jnp.float32), W).reshape(1, W * Fh)
    w1_big = _banded_conv_weight(0.1 * w1, W)                      # (3*W*Fh, W*Fout)
    b1_big = jnp.tile(0.1 * b1.astype(jnp.float32), W).reshape(1, W * Fout)
    if learned_shortcut:
        w1_big = jnp.concatenate(
            [w1_big, _blockdiag_shortcut_weight(ws, W)], axis=0)   # (+W*Cin rows)
    w1_big = w1_big.astype(dot_dtype)
    K1 = w1_big.shape[0]

    kernel = functools.partial(_ac_resnet_kernel, H, W, Cin, Fh, Fout,
                               block_n, learned_shortcut, dot_dtype)

    out = pl.pallas_call(
        kernel,
        out_shape=jax.ShapeDtypeStruct((Np, H, W * Fout), jnp.float32),
        grid_spec=pltpu.PrefetchScalarGridSpec(
            num_scalar_prefetch=0,
            grid=(nb,),
            in_specs=[
                pl.BlockSpec((block_n, H, W * Cin), lambda n: (n, 0, 0)),
                pl.BlockSpec((3 * W * Cin, W * Fh), lambda n: (0, 0)),
                pl.BlockSpec((1, W * Fh), lambda n: (0, 0)),
                pl.BlockSpec((K1, W * Fout), lambda n: (0, 0)),
                pl.BlockSpec((1, W * Fout), lambda n: (0, 0)),
            ],
            out_specs=pl.BlockSpec((block_n, H, W * Fout),
                                   lambda n: (n, 0, 0)),
        ),
        compiler_params=pltpu.CompilerParams(
            dimension_semantics=("parallel",)),        # batch steps independent
    )(x, w0_big, b0_big, w1_big, b1_big)

    return out[:N].reshape(N, H, W, Fout)


def ac_resnet_block_nchw(x_nchw, params, *, block_n=None, dot_dtype=jnp.bfloat16):
    """PyTorch-facing wrapper: NCHW in, NCHW out (matches Ac_ResnetBlock.forward).

    Keep the surrounding model NHWC and call ac_resnet_block_nhwc directly to
    avoid these two boundary transposes (an extra HBM pass each)."""
    w0, b0, w1, b1, ws = params
    x_nhwc = jnp.transpose(x_nchw, (0, 2, 3, 1))
    y_nhwc = ac_resnet_block_nhwc(x_nhwc, w0, b0, w1, b1, ws,
                                  block_n=block_n, dot_dtype=dot_dtype)
    return jnp.transpose(y_nhwc, (0, 3, 1, 2))


def reference_nhwc(x, w0, b0, w1, b1, ws=None):
    """Plain-JAX reference (NHWC), highest matmul precision."""
    hp = jax.lax.Precision.HIGHEST

    def conv3x3(a, w, b):
        N, H, W, _ = a.shape
        ap = jnp.pad(a, ((0, 0), (1, 1), (1, 1), (0, 0)))
        out = jnp.zeros((N, H, W, w.shape[-1]), jnp.float32)
        for kh in range(3):
            for kw in range(3):
                out = out + jnp.einsum('nhwc,cf->nhwf',
                                       ap[:, kh:kh + H, kw:kw + W, :], w[kh, kw],
                                       precision=hp)
        return out + b

    lr = lambda v: jnp.where(v > 0, v, 0.2 * v)
    dx = conv3x3(lr(x), w0, b0)
    dx = conv3x3(lr(dx), w1, b1)
    xs = x if ws is None else jnp.einsum('nhwc,cf->nhwf', x, ws, precision=hp)
    return xs + 0.1 * dx


def make_params(key, fin, fout):
    """Deterministic synthetic parameters (shapes match the PyTorch __init__)."""
    fhidden = min(fin, fout)
    learned_shortcut = fin != fout
    k0, k1, k2, k3, k4 = jax.random.split(key, 5)
    w0 = 0.1 * jax.random.normal(k0, (3, 3, fin, fhidden), jnp.float32)   # HWIO
    b0 = 0.1 * jax.random.normal(k1, (fhidden,), jnp.float32)
    w1 = 0.1 * jax.random.normal(k2, (3, 3, fhidden, fout), jnp.float32)
    b1 = 0.1 * jax.random.normal(k3, (fout,), jnp.float32)
    ws = (0.1 * jax.random.normal(k4, (fin, fout), jnp.float32)
          if learned_shortcut else None)
    return (w0, b0, w1, b1, ws)


if __name__ == "__main__":
    key = jax.random.PRNGKey(0)
    kx, kp, kx2, kp2 = jax.random.split(key, 4)

    # --- learned-shortcut path (fin != fout): shortcut folded into conv_1 GEMM ---
    N, fin, fout, H, W = 2, 4, 8, 16, 16
    x_nchw = jax.random.normal(kx, (N, fin, H, W), jnp.float32)
    params = make_params(kp, fin, fout)
    ref = reference_nhwc(jnp.transpose(x_nchw, (0, 2, 3, 1)), *params)

    # f32 MXU path
    out_f32 = jax.block_until_ready(
        ac_resnet_block_nchw(x_nchw, params, dot_dtype=jnp.float32))
    assert out_f32.shape == (N, fout, H, W), out_f32.shape
    np.testing.assert_allclose(np.asarray(jnp.transpose(out_f32, (0, 2, 3, 1))),
                               np.asarray(ref), rtol=5e-3, atol=5e-3)

    # bf16 MXU-input path (default): f32 accumulation, bf16-appropriate tolerance
    out_bf16 = jax.block_until_ready(
        ac_resnet_block_nchw(x_nchw, params, dot_dtype=jnp.bfloat16))
    np.testing.assert_allclose(np.asarray(jnp.transpose(out_bf16, (0, 2, 3, 1))),
                               np.asarray(ref), rtol=2e-2, atol=2e-2)

    # --- identity-shortcut path (fin == fout): residual is an exact f32 add ---
    N2, f2 = 2, 8
    x2_nchw = jax.random.normal(kx2, (N2, f2, H, W), jnp.float32)
    params2 = make_params(kp2, f2, f2)
    out2 = jax.block_until_ready(
        ac_resnet_block_nchw(x2_nchw, params2, dot_dtype=jnp.float32))
    ref2 = reference_nhwc(jnp.transpose(x2_nchw, (0, 2, 3, 1)), *params2)
    np.testing.assert_allclose(np.asarray(jnp.transpose(out2, (0, 2, 3, 1))),
                               np.asarray(ref2), rtol=5e-3, atol=5e-3)

    print("KERNEL_OK")
</pallas_src>

<mosaic_0001>
module attributes {stable_mosaic.version = 11 : i64} {
  func.func @_ac_resnet_kernel(%arg0: i32, %arg1: memref<1x16x64xf32, #tpu.memory_space<vmem>>, %arg2: memref<192x64xf32, #tpu.memory_space<vmem>>, %arg3: memref<1x64xf32, #tpu.memory_space<vmem>>, %arg4: memref<256x128xf32, #tpu.memory_space<vmem>>, %arg5: memref<1x128xf32, #tpu.memory_space<vmem>>, %arg6: memref<1x16x128xf32, #tpu.memory_space<vmem>>) attributes {dimension_semantics = [#tpu.dimension_semantics<parallel>], iteration_bounds = array<i64: 2>, scalar_prefetch = 0 : i64, scratch_operands = 0 : i64, tpu.core_type = #tpu.core_type<tc>, window_params = [{transform_indices = @transform_0, window_bounds = array<i64: 1, 16, 64>}, {pipeline_mode = #tpu.pipeline_mode<synchronous>, transform_indices = @transform_1, window_bounds = array<i64: 192, 64>}, {pipeline_mode = #tpu.pipeline_mode<synchronous>, transform_indices = @transform_2, window_bounds = array<i64: 1, 64>}, {pipeline_mode = #tpu.pipeline_mode<synchronous>, transform_indices = @transform_3, window_bounds = array<i64: 256, 128>}, {pipeline_mode = #tpu.pipeline_mode<synchronous>, transform_indices = @transform_4, window_bounds = array<i64: 1, 128>}, {transform_indices = @transform_5, window_bounds = array<i64: 1, 16, 128>}]} {
    %c0 = arith.constant 0 : index
    %c0_0 = arith.constant 0 : index
    %c0_1 = arith.constant 0 : index
    %0 = vector.load %arg1[%c0, %c0_0, %c0_1] : memref<1x16x64xf32, #tpu.memory_space<vmem>>, vector<1x16x64xf32>
    %cst = arith.constant 0.000000e+00 : f32
    %1 = vector.broadcast %cst : f32 to vector<1x16x64xf32>
    %2 = arith.cmpf ogt, %0, %1 : vector<1x16x64xf32>
    %cst_2 = arith.constant 2.000000e-01 : f32
    %3 = vector.broadcast %cst_2 : f32 to vector<1x16x64xf32>
    %4 = arith.mulf %3, %0 : vector<1x16x64xf32>
    %5 = arith.select %2, %0, %4 : vector<1x16x64xi1>, vector<1x16x64xf32>
    %cst_3 = arith.constant 0.000000e+00 : f32
    %6 = vector.broadcast %cst_3 : f32 to vector<1x1x64xf32>
    %7 = tpu.concatenate %6, %5, %6 in 1 : vector<1x1x64xf32>, vector<1x16x64xf32>, vector<1x1x64xf32> -> vector<1x18x64xf32>
    %8 = vector.extract_strided_slice %7 {offsets = [0, 0, 0], sizes = [1, 16, 64], strides = [1, 1, 1]} : vector<1x18x64xf32> to vector<1x16x64xf32>
    %9 = vector.extract_strided_slice %7 {offsets = [0, 1, 0], sizes = [1, 16, 64], strides = [1, 1, 1]} : vector<1x18x64xf32> to vector<1x16x64xf32>
    %10 = vector.extract_strided_slice %7 {offsets = [0, 2, 0], sizes = [1, 16, 64], strides = [1, 1, 1]} : vector<1x18x64xf32> to vector<1x16x64xf32>
    %11 = tpu.concatenate %8, %9, %10 in 2 : vector<1x16x64xf32>, vector<1x16x64xf32>, vector<1x16x64xf32> -> vector<1x16x192xf32>
    %12 = vector.shape_cast %11 : vector<1x16x192xf32> to vector<16x192xf32>
    %c0_4 = arith.constant 0 : index
    %c0_5 = arith.constant 0 : index
    %13 = vector.load %arg2[%c0_4, %c0_5] : memref<192x64xf32, #tpu.memory_space<vmem>>, vector<192x64xf32>
    %cst_6 = arith.constant dense<0.000000e+00> : vector<16x64xf32>
    %14 = tpu.matmul %12, %13, %cst_6 {dimension_numbers = #tpu.dot_dimension_numbers<[1], [0], [0], [1], [0, 0, 1, 1], [], []>} : vector<16x192xf32>, vector<192x64xf32>, vector<16x64xf32> -> vector<16x64xf32>
    %c0_7 = arith.constant 0 : index
    %c0_8 = arith.constant 0 : index
    %15 = vector.load %arg3[%c0_7, %c0_8] : memref<1x64xf32, #tpu.memory_space<vmem>>, vector<1x64xf32>
    %16 = vector.broadcast %15 : vector<1x64xf32> to vector<16x64xf32>
    %17 = arith.addf %14, %16 : vector<16x64xf32>
    %cst_9 = arith.constant 0.000000e+00 : f32
    %18 = vector.broadcast %cst_9 : f32 to vector<16x64xf32>
    %19 = arith.cmpf ogt, %17, %18 : vector<16x64xf32>
    %cst_10 = arith.constant 2.000000e-01 : f32
    %20 = vector.broadcast %cst_10 : f32 to vector<16x64xf32>
    %21 = arith.mulf %20, %17 : vector<16x64xf32>
    %22 = arith.select %19, %17, %21 : vector<16x64xi1>, vector<16x64xf32>
    %23 = vector.shape_cast %22 : vector<16x64xf32> to vector<1x16x64xf32>
    %cst_11 = arith.constant 0.000000e+00 : f32
    %24 = vector.broadcast %cst_11 : f32 to vector<1x1x64xf32>
    %25 = tpu.concatenate %24, %23, %24 in 1 : vector<1x1x64xf32>, vector<1x16x64xf32>, vector<1x1x64xf32> -> vector<1x18x64xf32>
    %26 = vector.extract_strided_slice %25 {offsets = [0, 0, 0], sizes = [1, 16, 64], strides = [1, 1, 1]} : vector<1x18x64xf32> to vector<1x16x64xf32>
    %27 = vector.extract_strided_slice %25 {offsets = [0, 1, 0], sizes = [1, 16, 64], strides = [1, 1, 1]} : vector<1x18x64xf32> to vector<1x16x64xf32>
    %28 = vector.extract_strided_slice %25 {offsets = [0, 2, 0], sizes = [1, 16, 64], strides = [1, 1, 1]} : vector<1x18x64xf32> to vector<1x16x64xf32>
    %29 = tpu.concatenate %26, %27, %28, %0 in 2 : vector<1x16x64xf32>, vector<1x16x64xf32>, vector<1x16x64xf32>, vector<1x16x64xf32> -> vector<1x16x256xf32>
    %30 = vector.shape_cast %29 : vector<1x16x256xf32> to vector<16x256xf32>
    %c0_12 = arith.constant 0 : index
    %c0_13 = arith.constant 0 : index
    %31 = vector.load %arg4[%c0_12, %c0_13] : memref<256x128xf32, #tpu.memory_space<vmem>>, vector<256x128xf32>
    %cst_14 = arith.constant dense<0.000000e+00> : vector<16x128xf32>
    %32 = tpu.matmul %30, %31, %cst_14 {dimension_numbers = #tpu.dot_dimension_numbers<[1], [0], [0], [1], [0, 0, 1, 1], [], []>} : vector<16x256xf32>, vector<256x128xf32>, vector<16x128xf32> -> vector<16x128xf32>
    %c0_15 = arith.constant 0 : index
    %c0_16 = arith.constant 0 : index
    %33 = vector.load %arg5[%c0_15, %c0_16] : memref<1x128xf32, #tpu.memory_space<vmem>>, vector<1x128xf32>
    %34 = vector.broadcast %33 : vector<1x128xf32> to vector<16x128xf32>
    %35 = arith.addf %32, %34 : vector<16x128xf32>
    %36 = vector.shape_cast %35 : vector<16x128xf32> to vector<1x16x128xf32>
    %c0_17 = arith.constant 0 : index
    %c0_18 = arith.constant 0 : index
    %c0_19 = arith.constant 0 : index
    %37 = vector.load %arg6[%c0_17, %c0_18, %c0_19] : memref<1x16x128xf32, #tpu.memory_space<vmem>>, vector<1x16x128xf32>
    tpu.vector_store %arg6[%c0_17, %c0_18, %c0_19], %36 {strides = array<i32>} : memref<1x16x128xf32, #tpu.memory_space<vmem>>, vector<1x16x128xf32>,
    return
  }
  func.func @transform_0(%arg0: i32) -> (i32, i32, i32) {
    %c0_i32 = arith.constant 0 : i32
    %c0_i32_0 = arith.constant 0 : i32
    %c0_i32_1 = arith.constant 0 : i32
    return %arg0, %c0_i32, %c0_i32_0 : i32, i32, i32
  }
  func.func @transform_1(%arg0: i32) -> (i32, i32) {
    %c0_i32 = arith.constant 0 : i32
    %c0_i32_0 = arith.constant 0 : i32
    %c0_i32_1 = arith.constant 0 : i32
    return %c0_i32, %c0_i32_0 : i32, i32
  }
  func.func @transform_2(%arg0: i32) -> (i32, i32) {
    %c0_i32 = arith.constant 0 : i32
    %c0_i32_0 = arith.constant 0 : i32
    %c0_i32_1 = arith.constant 0 : i32
    return %c0_i32, %c0_i32_0 : i32, i32
  }
  func.func @transform_3(%arg0: i32) -> (i32, i32) {
    %c0_i32 = arith.constant 0 : i32
    %c0_i32_0 = arith.constant 0 : i32
    %c0_i32_1 = arith.constant 0 : i32
    return %c0_i32, %c0_i32_0 : i32, i32
  }
  func.func @transform_4(%arg0: i32) -> (i32, i32) {
    %c0_i32 = arith.constant 0 : i32
    %c0_i32_0 = arith.constant 0 : i32
    %c0_i32_1 = arith.constant 0 : i32
    return %c0_i32, %c0_i32_0 : i32, i32
  }
  func.func @transform_5(%arg0: i32) -> (i32, i32, i32) {
    %c0_i32 = arith.constant 0 : i32
    %c0_i32_0 = arith.constant 0 : i32
    %c0_i32_1 = arith.constant 0 : i32
    return %arg0, %c0_i32, %c0_i32_0 : i32, i32, i32
  }
}

</mosaic_0001>

<llo_original>
// kernel: tpu_custom_call.1
$region0: #{tpu_custom_call.1}
  #allocation0 [shape = 'u32[]', space=smem, size = 0x4, offset = 0x4, fixed_abs, tag = 'smem constant byte address 0x4 - core index']
  #allocation1 [shape = 'u32[144,128]{1,0:T(1,128)}', space=vmem, size = 0x12000, scoped, tag = 'internal scratch']
  %s0 = inlined_call_operand.vmem [shape: f32[2,16,64], index: 0, kind: input, shape index: {}]
  %s1 = inlined_call_operand.vmem [shape: f32[192,64], index: 1, kind: input, shape index: {}]
  %s2 = inlined_call_operand.vmem [shape: f32[1,64], index: 2, kind: input, shape index: {}]
  %s3 = inlined_call_operand.vmem [shape: f32[256,128], index: 3, kind: input, shape index: {}]
  %s4 = inlined_call_operand.vmem [shape: f32[1,128], index: 4, kind: input, shape index: {}]
  %s5 = inlined_call_operand.hbm [shape: f32[2,16,128], index: 5, kind: output, shape index: {}]
  %s6 = sld [smem:[#allocation0]]
  $region53: #{tpu_custom_call.1} parent=0
    _
  %s8 = ssub.s32 1, %s6
  %s9 = scalar_select 0, %s8, %s6
  $region1: #{tpu_custom_call.1} parent=0
    #allocation2 [shape = 'u8[16384]{0}', space=vmem, size = 0x4000, scoped, tag = 'output window, operand 0']
    #allocation3 [shape = 's32[2]{0}', space=sflag, size = 0x8, scoped, tag = 'scoped memory for tpu_custom_call.1']
    %10 = vsyncpa [#allocation3], 0
    %s11 = scalar_lea.sflag [#allocation3], 1
    %12 = vsyncpa %s11, 0
    loop: start=0, step=1, limit=4
    $region2: #{tpu_custom_call.1} parent=1 // loop_pre_header
      _
    $region3: #{tpu_custom_call.1} parent=1 // loop_header
      %s14 = sphi 0, %s18
      %p15 = scmp.ge.s32.totalorder %s14, 4
      %s24 = sphi 0, %s26
      %s27 = sphi 0, %s24
      %s28 = sphi 0, %s27
      %s44 = sphi 0, %s28
      %s48 = sphi 0, %s48
      %s50 = sphi 0, %s48
      %s51 = sphi 0, %s50
      %s65 = sphi 0, %s51
      %s69 = sphi 0, %s69
      %s71 = sphi 0, %s69
      %s72 = sphi 0, %s71
      %s86 = sphi 0, %s72
      %s90 = sphi 0, %s90
      %s92 = sphi 0, %s90
      %s93 = sphi 0, %s92
      %s107 = sphi 0, %s93
      %s111 = sphi 0, %s111
      %s113 = sphi 0, %s111
      %s114 = sphi 0, %s113
      %s128 = sphi 0, %s114
      %s134 = sphi 0, %s136
      %s137 = sphi 0, %s134
      %s138 = sphi 0, %s137
      %s154 = sphi 0, %s138
    $region4: #{tpu_custom_call.1} parent=1 // loop_header_branch
      %17 = sbr.rel (%p15) target = $region8
    $region5: #{tpu_custom_call.1} parent=1 // loop_body
      %s19 = ssub.s32 %s14, 1
      %s20 = ssub.s32 %s14, 2
      %s21 = sadd.s32 %s14, 1
      %s22 = ssub.s32 %s14, %s21
      %p23 = scmp.eq.s32.totalorder %s22, 0
      %s25 = sadd.s32 %s24, 1
      %s26 = scalar_select %p23, %s24, %s25
      %p29 = pneg %p23
      %p30 = scmp.eq.s32.totalorder %s14, 1
      %p31 = por %p29, %p30
      %p32 = scmp.ne.s32.totalorder %s24, %s27
      %p33 = scmp.eq.s32.totalorder %s14, 0
      %p34 = por %p32, %p33
      %p35 = scmp.ne.s32.totalorder %s24, %s27
      %p36 = scmp.eq.s32.totalorder %s19, 1
      %p37 = por %p35, %p36
      %p38 = scmp.ne.s32.totalorder %s27, %s28
      %p39 = scmp.eq.s32.totalorder %s19, 0
      %p40 = por %p38, %p39
      %p41 = scmp.ne.s32.totalorder %s27, %s28
      %p42 = scmp.eq.s32.totalorder %s20, 1
      %p43 = por %p41, %p42
      %p45 = scmp.ne.s32.totalorder %s28, %s44
      %p46 = scmp.eq.s32.totalorder %s20, 0
      %p47 = por %p45, %p46
      %s49 = sadd.s32 %s48, 1
      %p52 = scmp.eq.s32.totalorder %s14, 1
      %p53 = scmp.ne.s32.totalorder %s48, %s50
      %p54 = scmp.eq.s32.totalorder %s14, 0
      %p55 = por %p53, %p54
      %p56 = scmp.ne.s32.totalorder %s48, %s50
      %p57 = scmp.eq.s32.totalorder %s19, 1
      %p58 = por %p56, %p57
      %p59 = scmp.ne.s32.totalorder %s50, %s51
      %p60 = scmp.eq.s32.totalorder %s19, 0
      %p61 = por %p59, %p60
      %p62 = scmp.ne.s32.totalorder %s50, %s51
      %p63 = scmp.eq.s32.totalorder %s20, 1
      %p64 = por %p62, %p63
      %p66 = scmp.ne.s32.totalorder %s51, %s65
      %p67 = scmp.eq.s32.totalorder %s20, 0
      %p68 = por %p66, %p67
      %s70 = sadd.s32 %s69, 1
      %p73 = scmp.eq.s32.totalorder %s14, 1
      %p74 = scmp.ne.s32.totalorder %s69, %s71
      %p75 = scmp.eq.s32.totalorder %s14, 0
      %p76 = por %p74, %p75
      %p77 = scmp.ne.s32.totalorder %s69, %s71
      %p78 = scmp.eq.s32.totalorder %s19, 1
      %p79 = por %p77, %p78
      %p80 = scmp.ne.s32.totalorder %s71, %s72
      %p81 = scmp.eq.s32.totalorder %s19, 0
      %p82 = por %p80, %p81
      %p83 = scmp.ne.s32.totalorder %s71, %s72
      %p84 = scmp.eq.s32.totalorder %s20, 1
      %p85 = por %p83, %p84
      %p87 = scmp.ne.s32.totalorder %s72, %s86
      %p88 = scmp.eq.s32.totalorder %s20, 0
      %p89 = por %p87, %p88
      %s91 = sadd.s32 %s90, 1
      %p94 = scmp.eq.s32.totalorder %s14, 1
      %p95 = scmp.ne.s32.totalorder %s90, %s92
      %p96 = scmp.eq.s32.totalorder %s14, 0
      %p97 = por %p95, %p96
      %p98 = scmp.ne.s32.totalorder %s90, %s92
      %p99 = scmp.eq.s32.totalorder %s19, 1
      %p100 = por %p98, %p99
      %p101 = scmp.ne.s32.totalorder %s92, %s93
      %p102 = scmp.eq.s32.totalorder %s19, 0
      %p103 = por %p101, %p102
      %p104 = scmp.ne.s32.totalorder %s92, %s93
      %p105 = scmp.eq.s32.totalorder %s20, 1
      %p106 = por %p104, %p105
      %p108 = scmp.ne.s32.totalorder %s93, %s107
      %p109 = scmp.eq.s32.totalorder %s20, 0
      %p110 = por %p108, %p109
      %s112 = sadd.s32 %s111, 1
      %p115 = scmp.eq.s32.totalorder %s14, 1
      %p116 = scmp.ne.s32.totalorder %s111, %s113
      %p117 = scmp.eq.s32.totalorder %s14, 0
      %p118 = por %p116, %p117
      %p119 = scmp.ne.s32.totalorder %s111, %s113
      %p120 = scmp.eq.s32.totalorder %s19, 1
      %p121 = por %p119, %p120
      %p122 = scmp.ne.s32.totalorder %s113, %s114
      %p123 = scmp.eq.s32.totalorder %s19, 0
      %p124 = por %p122, %p123
      %p125 = scmp.ne.s32.totalorder %s113, %s114
      %p126 = scmp.eq.s32.totalorder %s20, 1
      %p127 = por %p125, %p126
      %p129 = scmp.ne.s32.totalorder %s114, %s128
      %p130 = scmp.eq.s32.totalorder %s20, 0
      %p131 = por %p129, %p130
      %s132 = ssub.s32 %s14, %s21
      %p133 = scmp.eq.s32.totalorder %s132, 0
      %s135 = sadd.s32 %s134, 1
      %s136 = scalar_select %p133, %s134, %s135
      %p139 = pneg %p133
      %p140 = scmp.eq.s32.totalorder %s14, 1
      %p141 = por %p139, %p140
      %p142 = scmp.ne.s32.totalorder %s134, %s137
      %p143 = scmp.eq.s32.totalorder %s14, 0
      %p144 = por %p142, %p143
      %p145 = scmp.ne.s32.totalorder %s134, %s137
      %p146 = scmp.eq.s32.totalorder %s19, 1
      %p147 = por %p145, %p146
      %p148 = scmp.ne.s32.totalorder %s137, %s138
      %p149 = scmp.eq.s32.totalorder %s19, 0
      %p150 = por %p148, %p149
      %p151 = scmp.ne.s32.totalorder %s137, %s138
      %p152 = scmp.eq.s32.totalorder %s20, 1
      %p153 = por %p151, %p152
      %p155 = scmp.ne.s32.totalorder %s138, %s154
      %p156 = scmp.eq.s32.totalorder %s20, 0
      %p157 = por %p155, %p156
      %p158 = scmp.le.s32.totalorder 1, %s14
      %p159 = scmp.lt.s32.totalorder %s14, 3
      %p160 = pnand %p158, %p159
      %p161 = pneg %p160
      // Predicated region
      $region9: #{tpu_custom_call.1} parent=5 // pred_check
        _
      $region10: #{tpu_custom_call.1} parent=5 // pred_check_branch
        %163 = sbr.rel (%p160) target = $region12
      $region11: #{tpu_custom_call.1} parent=5 // pred_region
        %s164 = ssub.s32 %s14, 1
        // Predicated region
        $region13: #{tpu_custom_call.1} parent=11 // pred_check
          %p165 = pneg %p61
        $region14: #{tpu_custom_call.1} parent=11 // pred_check_branch
          %167 = sbr.rel (%p165) target = $region16
        $region15: #{tpu_custom_call.1} parent=11 // pred_region
          _
        $region16: #{tpu_custom_call.1} parent=11 // pred_fallthru
          _
        // Predicated region
        $region17: #{tpu_custom_call.1} parent=11 // pred_check
          %p168 = pneg %p82
        $region18: #{tpu_custom_call.1} parent=11 // pred_check_branch
          %170 = sbr.rel (%p168) target = $region20
        $region19: #{tpu_custom_call.1} parent=11 // pred_region
          _
        $region20: #{tpu_custom_call.1} parent=11 // pred_fallthru
          _
        // Predicated region
        $region21: #{tpu_custom_call.1} parent=11 // pred_check
          %p171 = pneg %p103
        $region22: #{tpu_custom_call.1} parent=11 // pred_check_branch
          %173 = sbr.rel (%p171) target = $region24
        $region23: #{tpu_custom_call.1} parent=11 // pred_region
          _
        $region24: #{tpu_custom_call.1} parent=11 // pred_fallthru
          _
        // Predicated region
        $region25: #{tpu_custom_call.1} parent=11 // pred_check
          %p174 = pneg %p124
        $region26: #{tpu_custom_call.1} parent=11 // pred_check_branch
          %176 = sbr.rel (%p174) target = $region28
        $region27: #{tpu_custom_call.1} parent=11 // pred_region
          _
        $region28: #{tpu_custom_call.1} parent=11 // pred_fallthru
          _
      $region12: #{tpu_custom_call.1} parent=5 // pred_fallthru
        _
      %p177 = scmp.lt.s32.totalorder %s14, 2
      // Predicated region
      $region29: #{tpu_custom_call.1} parent=5 // pred_check
        %p178 = pneg %p177
      $region30: #{tpu_custom_call.1} parent=5 // pred_check_branch
        %180 = sbr.rel (%p178) target = $region32
      $region31: #{tpu_custom_call.1} parent=5 // pred_region
        // Predicated region
        $region33: #{tpu_custom_call.1} parent=31 // pred_check
          %p181 = pneg %p34
        $region34: #{tpu_custom_call.1} parent=31 // pred_check_branch
          %183 = sbr.rel (%p181) target = $region36
        $region35: #{tpu_custom_call.1} parent=31 // pred_region
          %p184 = scmp.lt.s32.totalorder %s14, 1
          %s185 = scalar_select %p184, %s14, 1
          %s186 = smul.addr %s185, 2
          %s187 = smul.addr %s186, 8
          %s188 = scalar_lea.vmem %s0, %s187
        $region36: #{tpu_custom_call.1} parent=31 // pred_fallthru
          _
      $region32: #{tpu_custom_call.1} parent=5 // pred_fallthru
        _
      %p189 = scmp.le.s32.totalorder 1, %s14
      %p190 = scmp.lt.s32.totalorder %s14, 3
      %p191 = pnand %p189, %p190
      %p192 = pneg %p191
      // Predicated region
      $region37: #{tpu_custom_call.1} parent=5 // pred_check
        _
      $region38: #{tpu_custom_call.1} parent=5 // pred_check_branch
        %194 = sbr.rel (%p191) target = $region40
      $region39: #{tpu_custom_call.1} parent=5 // pred_region
        %s195 = ssub.s32 %s14, 1
        %p196 = scmp.lt.s32.totalorder %s19, 1
        %s197 = scalar_select %p196, %s19, 1
        %s198 = smul.addr %s197, 2
        %s199 = smul.addr %s198, 8
        %s200 = scalar_lea.vmem %s0, %s199
        %p201 = pneg %p40
        %p202 = pneg %p37
        %p203 = pneg %p61
        %p204 = pneg %p58
        %p205 = pneg %p82
        %p206 = pneg %p79
        %p207 = pneg %p103
        %p208 = pneg %p100
        %p209 = pneg %p124
        %p210 = pneg %p121
        %p211 = pneg %p150
        %p212 = pneg %p147
        %s213 = sand.u32 %s137, 1
        %s214 = scalar_lea.sflag [#allocation3], %s213
        %s215 = sand.u32 %s137, 1
        %s216 = smul.addr %s215, 16
        %s217 = scalar_lea.vmem [#allocation2], %s216
        %p218 = scmp.lt.s32.totalorder %s19, 1
        %s219 = scalar_select %p218, %s19, 1
        %s220 = smul.addr %s219, 2
        %s221 = smul.addr %s220, 8
        %s222 = scalar_lea.vmem %s0, %s221
        %v223 = vld [vmem:[%s222] sm:$0xff]
        %v224 = vld [vmem:[%s222 + $0x8] sm:$0xff]
        %vm225 = vcmp.gt.f32.partialorder %v223, 0.0
        %vm226 = vcmp.gt.f32.partialorder %v224, 0.0
        %v227 = vmul.f32 %v223, 0.2
        %v228 = vmul.f32 %v224, 0.2
        %v229 = vsel %vm225, %v223, %v227
        %v230 = vsel %vm226, %v224, %v228
        %vm233 = vcmask 1040384
        %v234 = vrot.slane %v229, 7
        %v235 = vrot.slane %v230, 7
        %v236 = vsel %vm233, %v234, %v235
        %v240 = vsel %vm233, 0.0, %v234
        %v241 = vsel %vm233, %v235, 0.0
        %vm244 = vcmask 1046528
        %v245 = vrot.slane %v240, 1
        %v246 = vrot.slane %v236, 1
        %v247 = vsel %vm244, %v245, %v246
        %v248 = vrot.slane %v241, 1
        %v249 = vsel %vm244, %v246, %v248
        %250 = vrot.lane.b32.xlu0 %v247, 64
        %v251 = vpop.permute.xlu0 %250
        %252 = vrot.lane.b32.xlu0 %v249, 64
        %v253 = vpop.permute.xlu0 %252
        %vm256 = vcmask 1045504
        %v257 = vrot.slane %v240, 2
        %v258 = vrot.slane %v236, 2
        %v259 = vsel %vm256, %v257, %v258
        %v260 = vrot.slane %v241, 2
        %v261 = vsel %vm256, %v258, %v260
        %vm262 = vcmask 523264
        %v263 = vsel %vm262, %v240, %v251
        %v264 = vsel %vm262, %v236, %v253
        %v265 = vld [vmem:[%s1] sm:$0xff]
        %v266 = vld [vmem:[%s1 + $0x8] sm:$0xff]
        %v267 = vld [vmem:[%s1 + $0x10] sm:$0xff]
        %v268 = vld [vmem:[%s1 + $0x18] sm:$0xff]
        %v269 = vld [vmem:[%s1 + $0x20] sm:$0xff]
        %v270 = vld [vmem:[%s1 + $0x28] sm:$0xff]
        %v271 = vld [vmem:[%s1 + $0x30] sm:$0xff]
        %v272 = vld [vmem:[%s1 + $0x38] sm:$0xff]
        %v273 = vld [vmem:[%s1 + $0x40] sm:$0xff]
        %v274 = vld [vmem:[%s1 + $0x48] sm:$0xff]
        %v275 = vld [vmem:[%s1 + $0x50] sm:$0xff]
        %v276 = vld [vmem:[%s1 + $0x58] sm:$0xff]
        %v277 = vld [vmem:[%s1 + $0x60] sm:$0xff]
        %v278 = vld [vmem:[%s1 + $0x68] sm:$0xff]
        %v279 = vld [vmem:[%s1 + $0x70] sm:$0xff]
        %v280 = vld [vmem:[%s1 + $0x78] sm:$0xff]
        %v281 = vld [vmem:[%s1 + $0x80] sm:$0xff]
        %v282 = vld [vmem:[%s1 + $0x88] sm:$0xff]
        %v283 = vld [vmem:[%s1 + $0x90] sm:$0xff]
        %v284 = vld [vmem:[%s1 + $0x98] sm:$0xff]
        %v285 = vld [vmem:[%s1 + $0xa0] sm:$0xff]
        %v286 = vld [vmem:[%s1 + $0xa8] sm:$0xff]
        %v287 = vld [vmem:[%s1 + $0xb0] sm:$0xff]
        %v288 = vld [vmem:[%s1 + $0xb8] sm:$0xff]
        %v289 = vld [vmem:[%s2] sm:$0x1]
        %v291 = vlaneseq
        %v292 = vshrl.u32 %v291, 7
        %v293 = vsub.s32 0, %v292
        %v294 = vrot.slane %v289, %v293
        %v296 = vsel %vm262, %v259, 0
        %v298 = vsel %vm262, %v261, 0
        %300 = vmatprep.subr.mxu0 0.0
        %301 = vmatpush1.msra.mxu0 %v280
        %302 = vmatprep.subr.mxu0 0.0
        %303 = vmatpush1.msra.mxu0 %v279
        %304 = vmatprep.subr.mxu0 0.0
        %305 = vmatpush1.msra.mxu0 %v278
        %306 = vmatprep.subr.mxu0 0.0
        %307 = vmatpush1.msra.mxu0 %v277
        %308 = vmatprep.subr.mxu0 0.0
        %309 = vmatpush1.msra.mxu0 %v276
        %310 = vmatprep.subr.mxu0 0.0
        %311 = vmatpush1.msra.mxu0 %v275
        %312 = vmatprep.subr.mxu0 0.0
        %313 = vmatpush1.msra.mxu0 %v274
        %314 = vmatprep.subr.mxu0 0.0
        %315 = vmatpush1.msra.mxu0 %v273
        %316 = vmatprep.subr.mxu0 0.0
        %317 = vmatpush1.msra.mxu0 %v272
        %318 = vmatprep.subr.mxu0 0.0
        %319 = vmatpush1.msra.mxu0 %v271
        %320 = vmatprep.subr.mxu0 0.0
        %321 = vmatpush1.msra.mxu0 %v270
        %322 = vmatprep.subr.mxu0 0.0
        %323 = vmatpush1.msra.mxu0 %v269
        %324 = vmatprep.subr.mxu0 0.0
        %325 = vmatpush1.msra.mxu0 %v268
        %326 = vmatprep.subr.mxu0 0.0
        %327 = vmatpush1.msra.mxu0 %v267
        %328 = vmatprep.subr.mxu0 0.0
        %329 = vmatpush1.msra.mxu0 %v266
        %330 = vmatprep.subr.mxu0 0.0
        %331 = vmatpush1.msra.mxu0 %v265
        %332 = vmatprep.subr.mxu0 0.0
        %333 = vmatpush2.msra.mxu0 0.0
        %334 = vmatprep.subr.mxu0 0.0
        %335 = vmatpush2.msra.mxu0 0.0
        %336 = vmatprep.subr.mxu0 0.0
        %337 = vmatpush2.msra.mxu0 0.0
        %338 = vmatprep.subr.mxu0 0.0
        %339 = vmatpush2.msra.mxu0 0.0
        %340 = vmatprep.subr.mxu0 0.0
        %341 = vmatpush2.msra.mxu0 0.0
        %342 = vmatprep.subr.mxu0 0.0
        %343 = vmatpush2.msra.mxu0 0.0
        %344 = vmatprep.subr.mxu0 0.0
        %345 = vmatpush2.msra.mxu0 0.0
        %346 = vmatprep.subr.mxu0 0.0
        %347 = vmatpush2.msra.mxu0 0.0
        %348 = vmatprep.subr.mxu0 0.0
        %349 = vmatpush2.msra.mxu0 %v288
        %350 = vmatprep.subr.mxu0 0.0
        %351 = vmatpush2.msra.mxu0 %v287
        %352 = vmatprep.subr.mxu0 0.0
        %353 = vmatpush2.msra.mxu0 %v286
        %354 = vmatprep.subr.mxu0 0.0
        %355 = vmatpush2.msra.mxu0 %v285
        %356 = vmatprep.subr.mxu0 0.0
        %357 = vmatpush2.msra.mxu0 %v284
        %358 = vmatprep.subr.mxu0 0.0
        %359 = vmatpush2.msra.mxu0 %v283
        %360 = vmatprep.subr.mxu0 0.0
        %361 = vmatpush2.msra.mxu0 %v282
        %362 = vmatprep.subr.mxu0 0.0
        %363 = vmatpush2.msra.mxu0 %v281
        %364 = vmatprep.mubr.f32.mxu0 %v296
        %365 = vmatmul.mubr.f32.gmra.mxu0 %v263
        %v366 = vpop.f32.mrf.mxu0
        %v367 = vadd.f32 %v294, %v366
        %v368 = vpop.f32.mrf.mxu0
        %369 = vmatprep.mubr.f32.mxu0 %v298
        %370 = vmatmul.mubr.f32.gmra.mxu0 %v264
        %v371 = vpop.f32.mrf.mxu0
        %v372 = vadd.f32 %v294, %v371
        %v373 = vpop.f32.mrf.mxu0
        %374 = vdwg.mxu0
        %vm375 = vcmp.gt.f32.partialorder %v367, 0.0
        %vm376 = vcmp.gt.f32.partialorder %v372, 0.0
        %v377 = vmul.f32 %v367, 0.2
        %v378 = vmul.f32 %v372, 0.2
        %v379 = vsel %vm375, %v367, %v377
        %v380 = vsel %vm376, %v372, %v378
        %v383 = vrot.slane %v379, 7
        %v384 = vrot.slane %v380, 7
        %v385 = vsel %vm233, %v383, %v384
        %v389 = vsel %vm233, 0.0, %v383
        %v390 = vsel %vm233, %v384, 0.0
        %v393 = vrot.slane %v389, 1
        %v394 = vrot.slane %v385, 1
        %v395 = vsel %vm244, %v393, %v394
        %v396 = vrot.slane %v390, 1
        %v397 = vsel %vm244, %v394, %v396
        %398 = vrot.lane.b32.xlu0 %v395, 64
        %v399 = vpop.permute.xlu0 %398
        %400 = vrot.lane.b32.xlu0 %v397, 64
        %v401 = vpop.permute.xlu0 %400
        %v404 = vrot.slane %v389, 2
        %v405 = vrot.slane %v385, 2
        %v406 = vsel %vm256, %v404, %v405
        %v407 = vrot.slane %v390, 2
        %v408 = vsel %vm256, %v405, %v407
        %413 = vrot.lane.b32.xlu0 %v223, 64
        %v414 = vpop.permute.xlu0 %413
        %415 = vrot.lane.b32.xlu0 %v224, 64
        %v416 = vpop.permute.xlu0 %415
        %v419 = vsel %vm262, %v389, %v399
        %v420 = vsel %vm262, %v385, %v401
        %v421 = vsel %vm262, %v406, %v414
        %v422 = vsel %vm262, %v408, %v416
        %v423 = vld [vmem:[%s3] sm:$0xff]
        %v424 = vld [vmem:[%s3 + $0x8] sm:$0xff]
        %v425 = vld [vmem:[%s3 + $0x10] sm:$0xff]
        %v426 = vld [vmem:[%s3 + $0x18] sm:$0xff]
        %v427 = vld [vmem:[%s3 + $0x20] sm:$0xff]
        %v428 = vld [vmem:[%s3 + $0x28] sm:$0xff]
        %v429 = vld [vmem:[%s3 + $0x30] sm:$0xff]
        %v430 = vld [vmem:[%s3 + $0x38] sm:$0xff]
        %v431 = vld [vmem:[%s3 + $0x40] sm:$0xff]
        %v432 = vld [vmem:[%s3 + $0x48] sm:$0xff]
        %v433 = vld [vmem:[%s3 + $0x50] sm:$0xff]
        %v434 = vld [vmem:[%s3 + $0x58] sm:$0xff]
        %v435 = vld [vmem:[%s3 + $0x60] sm:$0xff]
        %v436 = vld [vmem:[%s3 + $0x68] sm:$0xff]
        %v437 = vld [vmem:[%s3 + $0x70] sm:$0xff]
        %v438 = vld [vmem:[%s3 + $0x78] sm:$0xff]
        %v439 = vld [vmem:[%s3 + $0x80] sm:$0xff]
        %v440 = vld [vmem:[%s3 + $0x88] sm:$0xff]
        %v441 = vld [vmem:[%s3 + $0x90] sm:$0xff]
        %v442 = vld [vmem:[%s3 + $0x98] sm:$0xff]
        %v443 = vld [vmem:[%s3 + $0xa0] sm:$0xff]
        %v444 = vld [vmem:[%s3 + $0xa8] sm:$0xff]
        %v445 = vld [vmem:[%s3 + $0xb0] sm:$0xff]
        %v446 = vld [vmem:[%s3 + $0xb8] sm:$0xff]
        %v447 = vld [vmem:[%s3 + $0xc0] sm:$0xff]
        %v448 = vld [vmem:[%s3 + $0xc8] sm:$0xff]
        %v449 = vld [vmem:[%s3 + $0xd0] sm:$0xff]
        %v450 = vld [vmem:[%s3 + $0xd8] sm:$0xff]
        %v451 = vld [vmem:[%s3 + $0xe0] sm:$0xff]
        %v452 = vld [vmem:[%s3 + $0xe8] sm:$0xff]
        %v453 = vld [vmem:[%s3 + $0xf0] sm:$0xff]
        %v454 = vld [vmem:[%s3 + $0xf8] sm:$0xff]
        %v455 = vld [vmem:[%s4] sm:$0x1]
        %v457 = vlaneseq
        %v458 = vshrl.u32 %v457, 7
        %v459 = vsub.s32 0, %v458
        %v460 = vrot.slane %v455, %v459
        %462 = vmatprep.subr.mxu0 0.0
        %463 = vmatpush1.msra.mxu0 %v438
        %464 = vmatprep.subr.mxu0 0.0
        %465 = vmatpush1.msra.mxu0 %v437
        %466 = vmatprep.subr.mxu0 0.0
        %467 = vmatpush1.msra.mxu0 %v436
        %468 = vmatprep.subr.mxu0 0.0
        %469 = vmatpush1.msra.mxu0 %v435
        %470 = vmatprep.subr.mxu0 0.0
        %471 = vmatpush1.msra.mxu0 %v434
        %472 = vmatprep.subr.mxu0 0.0
        %473 = vmatpush1.msra.mxu0 %v433
        %474 = vmatprep.subr.mxu0 0.0
        %475 = vmatpush1.msra.mxu0 %v432
        %476 = vmatprep.subr.mxu0 0.0
        %477 = vmatpush1.msra.mxu0 %v431
        %478 = vmatprep.subr.mxu0 0.0
        %479 = vmatpush1.msra.mxu0 %v430
        %480 = vmatprep.subr.mxu0 0.0
        %481 = vmatpush1.msra.mxu0 %v429
        %482 = vmatprep.subr.mxu0 0.0
        %483 = vmatpush1.msra.mxu0 %v428
        %484 = vmatprep.subr.mxu0 0.0
        %485 = vmatpush1.msra.mxu0 %v427
        %486 = vmatprep.subr.mxu0 0.0
        %487 = vmatpush1.msra.mxu0 %v426
        %488 = vmatprep.subr.mxu0 0.0
        %489 = vmatpush1.msra.mxu0 %v425
        %490 = vmatprep.subr.mxu0 0.0
        %491 = vmatpush1.msra.mxu0 %v424
        %492 = vmatprep.subr.mxu0 0.0
        %493 = vmatpush1.msra.mxu0 %v423
        %494 = vmatprep.subr.mxu0 0.0
        %495 = vmatpush2.msra.mxu0 %v454
        %496 = vmatprep.subr.mxu0 0.0
        %497 = vmatpush2.msra.mxu0 %v453
        %498 = vmatprep.subr.mxu0 0.0
        %499 = vmatpush2.msra.mxu0 %v452
        %500 = vmatprep.subr.mxu0 0.0
        %501 = vmatpush2.msra.mxu0 %v451
        %502 = vmatprep.subr.mxu0 0.0
        %503 = vmatpush2.msra.mxu0 %v450
        %504 = vmatprep.subr.mxu0 0.0
        %505 = vmatpush2.msra.mxu0 %v449
        %506 = vmatprep.subr.mxu0 0.0
        %507 = vmatpush2.msra.mxu0 %v448
        %508 = vmatprep.subr.mxu0 0.0
        %509 = vmatpush2.msra.mxu0 %v447
        %510 = vmatprep.subr.mxu0 0.0
        %511 = vmatpush2.msra.mxu0 %v446
        %512 = vmatprep.subr.mxu0 0.0
        %513 = vmatpush2.msra.mxu0 %v445
        %514 = vmatprep.subr.mxu0 0.0
        %515 = vmatpush2.msra.mxu0 %v444
        %516 = vmatprep.subr.mxu0 0.0
        %517 = vmatpush2.msra.mxu0 %v443
        %518 = vmatprep.subr.mxu0 0.0
        %519 = vmatpush2.msra.mxu0 %v442
        %520 = vmatprep.subr.mxu0 0.0
        %521 = vmatpush2.msra.mxu0 %v441
        %522 = vmatprep.subr.mxu0 0.0
        %523 = vmatpush2.msra.mxu0 %v440
        %524 = vmatprep.subr.mxu0 0.0
        %525 = vmatpush2.msra.mxu0 %v439
        %526 = vmatprep.mubr.f32.mxu0 %v421
        %527 = vmatmul.mubr.f32.gmra.mxu0 %v419
        %v528 = vpop.f32.mrf.mxu0
        %v529 = vadd.f32 %v460, %v528
        %v530 = vpop.f32.mrf.mxu0
        %531 = vmatprep.mubr.f32.mxu0 %v422
        %532 = vmatmul.mubr.f32.gmra.mxu0 %v420
        %v533 = vpop.f32.mrf.mxu0
        %v534 = vadd.f32 %v460, %v533
        %v535 = vpop.f32.mrf.mxu0
        %536 = vdwg.mxu0
        %537 = vst [vmem:[%s217] sm:$0xff] %v529
        %538 = vst [vmem:[%s217 + $0x8] sm:$0xff] %v534
        %s539 = sand.u32 %s137, 1
        %s540 = scalar_lea.sflag [#allocation3], %s539
        %s541 = sand.u32 %s137, 1
        %s542 = smul.addr %s541, 16
        %s543 = scalar_lea.vmem [#allocation2], %s542
        // Predicated region
        $region41: #{tpu_custom_call.1} parent=39 // pred_check
          %p544 = pneg %p147
        $region42: #{tpu_custom_call.1} parent=39 // pred_check_branch
          %546 = sbr.rel (%p544) target = $region44
        $region43: #{tpu_custom_call.1} parent=39 // pred_region
          %s548 = ssub.s32 256, 256
          %549 = vsyncadd %s540, %s548
          %s550 = smul.addr %s19, 2
          %s551 = smul.addr %s550, 128
          %s552 = scalar_lea.hbm %s5, %s551
          %s553 = sshll.u32 %s543, 4
          %s554 = int_to_ptr.vmem [resolvable:$true] %s553
          %559 = dma.vmem_to_hbm [thread:$0]  %s554, 256, %s552, %s540, 128, 128, 8
        $region44: #{tpu_custom_call.1} parent=39 // pred_fallthru
          _
      $region40: #{tpu_custom_call.1} parent=5 // pred_fallthru
        _
      %p560 = scmp.le.s32.totalorder 2, %s14
      // Predicated region
      $region45: #{tpu_custom_call.1} parent=5 // pred_check
        %p561 = pneg %p560
      $region46: #{tpu_custom_call.1} parent=5 // pred_check_branch
        %563 = sbr.rel (%p561) target = $region48
      $region47: #{tpu_custom_call.1} parent=5 // pred_region
        %s564 = ssub.s32 %s14, 2
        // Predicated region
        $region49: #{tpu_custom_call.1} parent=47 // pred_check
          %p565 = pneg %p153
        $region50: #{tpu_custom_call.1} parent=47 // pred_check_branch
          %567 = sbr.rel (%p565) target = $region52
        $region51: #{tpu_custom_call.1} parent=47 // pred_region
          %s568 = sand.u32 %s138, 1
          %s569 = scalar_lea.sflag [#allocation3], %s568
          %s570 = sand.u32 %s138, 1
          %s571 = smul.addr %s570, 16
          %s572 = scalar_lea.vmem [#allocation2], %s571
          %573 = dma.done %s569, 256
        $region52: #{tpu_custom_call.1} parent=47 // pred_fallthru
          _
      $region48: #{tpu_custom_call.1} parent=5 // pred_fallthru
        _
    $region6: #{tpu_custom_call.1} parent=1 // loop_footer
      %s18 = sadd.s32 1, %s14
    $region7: #{tpu_custom_call.1} parent=1 // loop_footer_branch
      %13 = sbr.rel target = $region3
    $region8: #{tpu_custom_call.1} parent=1 // loop_exit
      _
    %574 = vsyncpa [#allocation3], 1
    %s575 = scalar_lea.sflag [#allocation3], 1
    %576 = vsyncpa %s575, 1

</llo_original>
